<compile_context>
chip_gen: v5e
topology: v5e:2x2
jax: 0.10.0
libtpu: 0.0.40
codegen_flags: <defaults>
</compile_context>

<pallas_src>
import functools

import jax
import jax.numpy as jnp
from jax import lax
from jax.experimental import pallas as pl
from jax.experimental.pallas import tpu as pltpu

LANE = 128


def _round_up(x, m):
    return ((x + m - 1) // m) * m


def _pad_last(a, target):
    pad = target - a.shape[-1]
    if pad == 0:
        return a
    return jnp.pad(a, [(0, 0)] * (a.ndim - 1) + [(0, pad)])


def _pick_tile(n, target, mult=16):
    """Largest tile <= target dividing n (prefer multiples of 16 for bf16
    sublane packing, fall back to 8), else the full dim."""
    if n <= target:
        return n
    for m in (mult, 8):
        start = target - (target % m)
        for t in range(start, 0, -m):
            if n % t == 0:
                return t
    return n


def _pick_batch_block(B, Sq, tq):
    """Batch elements fused into each grid step (flattened into the matmul M
    dim), keeping >= 2 blocks on the parallel (batch) axis when possible."""
    n_q = max(1, Sq // tq)
    bt = min(B, max(1, 256 // max(tq, 1)))
    while B % bt:
        bt -= 1
    # v7x has 2 TensorCores sharded over the "parallel" axis; don't collapse
    # the parallel extent to 1 if we can avoid it.
    while bt > 1 and (B // bt) * n_q < 2:
        bt -= 1
        while B % bt:
            bt -= 1
    return max(bt, 1)


def cross_attention_kernel(
    x1_ref,    # (bt, tq,  d_in_q)   f32   (valid every step)
    x2_ref,    # (bt, tkv, d_in_kv)  f32   (only consumed while qi == 0)
    wq_ref,    # (d_in_q,  dkq_p)    bf16
    bq_ref,    # (1, dkq_p)          f32
    wkv_ref,   # (d_in_kv, dkq_p+dv_p) bf16  ([Wk | Wv] fused)
    bkv_ref,   # (1, dkq_p+dv_p)     f32    ([bk | bv(+ones col)] fused)
    o_ref,     # (bt, tq, dv_p)
    q_sc,      # VMEM (bt, tq, dkq_p)        bf16
    m_sc,      # VMEM (bt, tq, 1)            f32
    l_sc,      # VMEM (bt, tq, 1)            f32
    acc_sc,    # VMEM (bt, tq, dv_p)         f32
    kc_sc,     # VMEM (nkv, bt, tkv, dkq_p)  bf16  persistent K cache
    vc_sc,     # VMEM (nkv, bt, tkv, dv_p)   bf16  persistent V cache
    *,
    scale, dkq_p, d_out_v, use_ones_col,
):
    qi = pl.program_id(1)
    ki = pl.program_id(2)

    bt, tq, d_in_q = x1_ref.shape
    _, tkv, d_in_kv = x2_ref.shape

    # ---- K/V projection: once per (batch-block, kv-tile), cached in VMEM. ----
    @pl.when(qi == 0)
    def _project_kv():
        x2 = x2_ref[...].reshape(bt * tkv, d_in_kv).astype(jnp.bfloat16)
        kv = jnp.dot(x2, wkv_ref[...], preferred_element_type=jnp.float32)
        kv = (kv + bkv_ref[...]).reshape(bt, tkv, -1)
        # dkq_p is 128-aligned, so both lane slices are layout-clean.
        kc_sc[ki] = kv[..., :dkq_p].astype(jnp.bfloat16)
        vc_sc[ki] = kv[..., dkq_p:].astype(jnp.bfloat16)

    # ---- Q projection + accumulator init: once per (batch-block, q-block). --
    @pl.when(ki == 0)
    def _init_q():
        x1 = x1_ref[...].reshape(bt * tq, d_in_q).astype(jnp.bfloat16)
        q = jnp.dot(x1, wq_ref[...], preferred_element_type=jnp.float32)
        q = (q + bq_ref[...]) * scale          # fold 1/sqrt(d_kq) into Q once
        q_sc[...] = q.reshape(bt, tq, -1).astype(jnp.bfloat16)
        m_sc[...] = jnp.full(m_sc.shape, -jnp.inf, dtype=m_sc.dtype)
        l_sc[...] = jnp.zeros(l_sc.shape, dtype=l_sc.dtype)
        acc_sc[...] = jnp.zeros(acc_sc.shape, dtype=acc_sc.dtype)

    # ---- Online-softmax flash step over this kv tile. ------------------------
    k = kc_sc[ki]                               # (bt, tkv, dkq_p) bf16
    v = vc_sc[ki]                               # (bt, tkv, dv_p)  bf16

    # Scores (bt, tq, tkv): contract on the last dims (no transpose), bf16 in,
    # f32 accumulate.
    s = lax.dot_general(
        q_sc[...], k,
        dimension_numbers=(((2,), (2,)), ((0,), (0,))),
        preferred_element_type=jnp.float32)

    m_prev = m_sc[...]
    m_new = jnp.maximum(m_prev, jnp.max(s, axis=-1, keepdims=True))
    alpha = jnp.exp(m_prev - m_new)
    # NOTE: on v6e/v7x the exp itself could run in bf16 for ~2x EUP throughput;
    # kept f32 here so the same path is also optimal on v5e (no bf16 VPU/EUP).
    p = jnp.exp(s - m_new).astype(jnp.bfloat16)

    pv = lax.dot_general(
        p, v,
        dimension_numbers=(((2,), (1,)), ((0,), (0,))),
        preferred_element_type=jnp.float32)     # (bt, tq, dv_p) f32

    if use_ones_col:
        # The all-ones padded V column means pv[..., d_out_v] == sum_k p[...,k]:
        # the softmax row-sum comes out of the MXU for free.
        row_sum = pv[..., d_out_v:d_out_v + 1]
    else:
        row_sum = jnp.sum(p.astype(jnp.float32), axis=-1, keepdims=True)

    l_sc[...] = alpha * l_sc[...] + row_sum
    acc_sc[...] = alpha * acc_sc[...] + pv
    m_sc[...] = m_new

    @pl.when(ki == pl.num_programs(2) - 1)
    def _finalize():
        inv_l = pl.reciprocal(l_sc[...], approx=True)   # EUP slot, ~free
        o_ref[...] = (acc_sc[...] * inv_l).astype(o_ref.dtype)


def cross_attention(x1, x2, params, *, q_block=256, kv_block=512):
    """x1: (B, Sq, d_in_q), x2: (B, Skv, d_in_kv) -> (B, Sq, d_out_v).

    q_block=256 fills the 256-wide MXU on v6e/v7x; on v5e a kv_block of 256
    may be preferable (sweep).
    """
    wq, bq, wk, bk, wv, bv = params
    B, Sq, d_in_q = x1.shape
    B2, Skv, d_in_kv = x2.shape
    assert B == B2
    d_out_kq = wq.shape[1]
    d_out_v = wv.shape[1]

    # Pad output-feature dims to the 128-lane width so every matmul and the
    # output store are lane-dense.  Zero-padded Q/K columns add nothing to the
    # contraction; padded V columns are sliced off after the kernel.
    dkq_p = _round_up(d_out_kq, LANE)
    dv_p = _round_up(d_out_v, LANE)
    use_ones_col = dv_p > d_out_v

    wq_p = _pad_last(wq, dkq_p).astype(jnp.bfloat16)
    bq_p = _pad_last(bq, dkq_p)
    wk_p = _pad_last(wk, dkq_p)
    wv_p = _pad_last(wv, dv_p)
    bk_p = _pad_last(bk, dkq_p)
    bv_p = _pad_last(bv, dv_p)
    if use_ones_col:
        # Ones in a padded V column -> PV matmul column d_out_v is the softmax
        # row-sum (zero extra MXU cost, removes a cross-lane reduction).
        bv_p = bv_p.at[0, d_out_v].set(1.0)
    # Fuse the K and V projections: one MXU pass over x2 per kv tile.
    wkv_p = jnp.concatenate([wk_p, wv_p], axis=1).astype(jnp.bfloat16)
    bkv_p = jnp.concatenate([bk_p, bv_p], axis=1)

    tq = _pick_tile(Sq, q_block)
    tkv = _pick_tile(Skv, kv_block)
    nkv = Skv // tkv
    bt = _pick_batch_block(B, Sq, tq)

    # Persistent bf16 K/V cache (independent of tkv); cap it so the whole
    # working set stays comfortable on v7x's 64 MiB VMEM.
    def cache_bytes(b):
        return b * Skv * (dkq_p + dv_p) * 2
    while bt > 1 and cache_bytes(bt) > (16 << 20):
        bt -= 1
        while B % bt:
            bt -= 1
    # TODO(synk): if cache_bytes(1) is still too large (very long Skv), fall
    # back to a separate hoisted K/V-projection pass instead of the VMEM cache.

    grid = (B // bt, Sq // tq, nkv)
    scale = 1.0 / float(d_out_kq) ** 0.5
    kernel = functools.partial(cross_attention_kernel, scale=scale,
                               dkq_p=dkq_p, d_out_v=d_out_v,
                               use_ones_col=use_ones_col)

    full = lambda b, qi, ki: (0, 0)   # grid-invariant weights / biases
    # NOTE: at real model sizes, single-buffering these grid-invariant operands
    # (pipeline_mode=pl.Buffered(1)) reclaims a few MiB of VMEM on v7x.

    def x2_map(b, qi, ki):
        # x2 is only consumed while qi == 0 (K/V cached afterwards).  For
        # qi > 0 collapse to a constant block index so consecutive grid steps
        # revisit the same block and the pipeline skips its HBM DMA.
        first_q = jnp.maximum(1 - qi, 0)          # 1 iff qi == 0
        return (b, ki * first_q, 0)

    itemsize = x1.dtype.itemsize
    flops = 2 * B * (Sq * d_in_q * dkq_p
                     + Skv * d_in_kv * (dkq_p + dv_p)
                     + Sq * Skv * (dkq_p + dv_p))
    bytes_accessed = (itemsize * (x1.size + x2.size + B * Sq * dv_p)
                      + 2 * (wq_p.size + wkv_p.size)
                      + 4 * (bq_p.size + bkv_p.size))

    # Explicit VMEM budget (v5e's default scoped limit is only 16 MiB).
    vmem_need = (
        2 * bt * tq * d_in_q * itemsize          # x1 (double-buffered)
        + 2 * bt * tkv * d_in_kv * itemsize      # x2 (double-buffered)
        + 2 * (wq_p.size * 2 + wkv_p.size * 2 + bq_p.size * 4 + bkv_p.size * 4)
        + 2 * bt * tq * dv_p * itemsize          # output (double-buffered)
        + bt * tq * dkq_p * 2                    # q_sc (bf16)
        + 2 * bt * tq * 4                        # m / l
        + bt * tq * dv_p * 4                     # acc
        + cache_bytes(bt)                        # K/V cache (bf16)
        + 6 * bt * tq * tkv * 4                  # s / p / pv intermediates
    )
    vmem_limit = max(min(int(vmem_need * 1.5) + (8 << 20), 100 << 20), 32 << 20)

    out_p = pl.pallas_call(
        kernel,
        out_shape=jax.ShapeDtypeStruct((B, Sq, dv_p), x1.dtype),
        grid_spec=pltpu.PrefetchScalarGridSpec(
            num_scalar_prefetch=0,
            grid=grid,
            in_specs=[
                pl.BlockSpec((bt, tq, d_in_q), lambda b, qi, ki: (b, qi, 0)),
                pl.BlockSpec((bt, tkv, d_in_kv), x2_map),
                pl.BlockSpec((d_in_q, dkq_p), full),
                pl.BlockSpec((1, dkq_p), full),
                pl.BlockSpec((d_in_kv, dkq_p + dv_p), full),
                pl.BlockSpec((1, dkq_p + dv_p), full),
            ],
            out_specs=pl.BlockSpec((bt, tq, dv_p), lambda b, qi, ki: (b, qi, 0)),
            scratch_shapes=[
                pltpu.VMEM((bt, tq, dkq_p), jnp.bfloat16),       # Q (scaled)
                pltpu.VMEM((bt, tq, 1), jnp.float32),            # running max
                pltpu.VMEM((bt, tq, 1), jnp.float32),            # running sum
                pltpu.VMEM((bt, tq, dv_p), jnp.float32),         # running ctx
                pltpu.VMEM((nkv, bt, tkv, dkq_p), jnp.bfloat16), # K cache
                pltpu.VMEM((nkv, bt, tkv, dv_p), jnp.bfloat16),  # V cache
            ],
        ),
        # Only the batch axis is "parallel": the K/V cache is filled while
        # qi == 0, so splitting the q axis across TensorCores (v7x megacore)
        # would leave one core's cache empty.
        compiler_params=pltpu.CompilerParams(
            dimension_semantics=("parallel", "arbitrary", "arbitrary"),
            vmem_limit_bytes=int(vmem_limit)),
        cost_estimate=pl.CostEstimate(
            flops=int(flops),
            transcendentals=int(B * Sq * (Skv + 1)),
            bytes_accessed=int(bytes_accessed)),
    )(x1, x2, wq_p, bq_p, wkv_p, bkv_p)

    # NOTE: if downstream consumers accept the 128-padded layout, return out_p
    # directly and skip this extra XLA read+write of the padded output.
    return out_p[..., :d_out_v]


def init_params(key, d_in_q, d_in_kv, d_out_kq, d_out_v):
    """Deterministic init matching nn.Linear shapes (stored as (d_in, d_out))."""
    ks = jax.random.split(key, 6)

    def lin(kw, kb, d_in, d_out):
        bound = 1.0 / (d_in ** 0.5)
        w = jax.random.uniform(kw, (d_in, d_out), jnp.float32, -bound, bound)
        b = jax.random.uniform(kb, (1, d_out), jnp.float32, -bound, bound)
        return w, b

    wq, bq = lin(ks[0], ks[1], d_in_q, d_out_kq)
    wk, bk = lin(ks[2], ks[3], d_in_kv, d_out_kq)
    wv, bv = lin(ks[4], ks[5], d_in_kv, d_out_v)
    return (wq, bq, wk, bk, wv, bv)


def cross_attention_ref(x1, x2, params):
    wq, bq, wk, bk, wv, bv = params
    q = x1 @ wq + bq
    k = x2 @ wk + bk
    v = x2 @ wv + bv
    s = jnp.einsum("bqd,bkd->bqk", q, k) / (wq.shape[1] ** 0.5)
    a = jax.nn.softmax(s, axis=-1)
    return jnp.einsum("bqk,bkd->bqd", a, v)


def _run_case(key, B, Sq, Skv, d_in_q, d_in_kv, d_out_kq, d_out_v):
    k1, k2, k3 = jax.random.split(key, 3)
    x1 = jax.random.normal(k1, (B, Sq, d_in_q), jnp.float32)
    x2 = jax.random.normal(k2, (B, Skv, d_in_kv), jnp.float32)
    params = init_params(k3, d_in_q, d_in_kv, d_out_kq, d_out_v)

    out = cross_attention(x1, x2, params)
    jax.block_until_ready(out)

    ref = cross_attention_ref(x1, x2, params)
    assert out.shape == (B, Sq, d_out_v)
    err = float(jnp.max(jnp.abs(out - ref)))
    # Tolerance covers bf16 MXU operands (f32 accumulate) + the EUP approximate
    # reciprocal used for the softmax denominator.
    assert jnp.allclose(out, ref, atol=3e-2, rtol=3e-2), f"max abs err {err}"


if __name__ == "__main__":
    # Small shape matching the module spec.
    _run_case(jax.random.PRNGKey(0), B=2, Sq=8, Skv=8,
              d_in_q=32, d_in_kv=32, d_out_kq=16, d_out_v=16)
    # Larger shape exercising kv tiling, the VMEM K/V cache and the
    # online-softmax accumulator.
    _run_case(jax.random.PRNGKey(1), B=2, Sq=256, Skv=1024,
              d_in_q=64, d_in_kv=64, d_out_kq=32, d_out_v=48)

    print("KERNEL_OK")
</pallas_src>

<mosaic_0001>
module attributes {stable_mosaic.version = 11 : i64} {
  func.func @cross_attention_kernel(%arg0: i32, %arg1: i32, %arg2: i32, %arg3: memref<1x8x32xf32, #tpu.memory_space<vmem>>, %arg4: memref<1x8x32xf32, #tpu.memory_space<vmem>>, %arg5: memref<32x128xbf16, #tpu.memory_space<vmem>>, %arg6: memref<1x128xf32, #tpu.memory_space<vmem>>, %arg7: memref<32x256xbf16, #tpu.memory_space<vmem>>, %arg8: memref<1x256xf32, #tpu.memory_space<vmem>>, %arg9: memref<1x8x128xf32, #tpu.memory_space<vmem>>, %arg10: memref<1x8x128xbf16, #tpu.memory_space<vmem>>, %arg11: memref<1x8x1xf32, #tpu.memory_space<vmem>>, %arg12: memref<1x8x1xf32, #tpu.memory_space<vmem>>, %arg13: memref<1x8x128xf32, #tpu.memory_space<vmem>>, %arg14: memref<1x1x8x128xbf16, #tpu.memory_space<vmem>>, %arg15: memref<1x1x8x128xbf16, #tpu.memory_space<vmem>>) attributes {dimension_semantics = [#tpu.dimension_semantics<parallel>, #tpu.dimension_semantics<arbitrary>, #tpu.dimension_semantics<arbitrary>], iteration_bounds = array<i64: 2, 1, 1>, scalar_prefetch = 0 : i64, scratch_operands = 6 : i64, tpu.core_type = #tpu.core_type<tc>, window_params = [{transform_indices = @transform_0, window_bounds = array<i64: 1, 8, 32>}, {transform_indices = @transform_1, window_bounds = array<i64: 1, 8, 32>}, {pipeline_mode = #tpu.pipeline_mode<synchronous>, transform_indices = @transform_2, window_bounds = array<i64: 32, 128>}, {pipeline_mode = #tpu.pipeline_mode<synchronous>, transform_indices = @transform_3, window_bounds = array<i64: 1, 128>}, {pipeline_mode = #tpu.pipeline_mode<synchronous>, transform_indices = @transform_4, window_bounds = array<i64: 32, 256>}, {pipeline_mode = #tpu.pipeline_mode<synchronous>, transform_indices = @transform_5, window_bounds = array<i64: 1, 256>}, {transform_indices = @transform_6, window_bounds = array<i64: 1, 8, 128>}]} {
    %c0_i32 = arith.constant 0 : i32
    %0 = arith.cmpi eq, %arg1, %c0_i32 : i32
    %1 = arith.extui %0 : i1 to i32
    %c0_i32_0 = arith.constant 0 : i32
    %2 = arith.cmpi ne, %1, %c0_i32_0 : i32
    scf.if %2 {
      %c0_33 = arith.constant 0 : index
      %c0_34 = arith.constant 0 : index
      %c0_35 = arith.constant 0 : index
      %39 = vector.load %arg4[%c0_33, %c0_34, %c0_35] : memref<1x8x32xf32, #tpu.memory_space<vmem>>, vector<1x8x32xf32>
      %40 = vector.shape_cast %39 : vector<1x8x32xf32> to vector<8x32xf32>
      %41 = arith.truncf %40 : vector<8x32xf32> to vector<8x32xbf16>
      %c0_36 = arith.constant 0 : index
      %c0_37 = arith.constant 0 : index
      %42 = vector.load %arg7[%c0_36, %c0_37] : memref<32x256xbf16, #tpu.memory_space<vmem>>, vector<32x256xbf16>
      %cst_38 = arith.constant dense<0.000000e+00> : vector<8x256xf32>
      %43 = tpu.matmul %41, %42, %cst_38 {dimension_numbers = #tpu.dot_dimension_numbers<[1], [0], [0], [1], [0, 0, 1, 1], [], []>} : vector<8x32xbf16>, vector<32x256xbf16>, vector<8x256xf32> -> vector<8x256xf32>
      %c0_39 = arith.constant 0 : index
      %c0_40 = arith.constant 0 : index
      %44 = vector.load %arg8[%c0_39, %c0_40] : memref<1x256xf32, #tpu.memory_space<vmem>>, vector<1x256xf32>
      %45 = vector.broadcast %44 : vector<1x256xf32> to vector<8x256xf32>
      %46 = arith.addf %43, %45 : vector<8x256xf32>
      %47 = vector.shape_cast %46 : vector<8x256xf32> to vector<1x8x256xf32>
      %48 = vector.extract_strided_slice %47 {offsets = [0, 0, 0], sizes = [1, 8, 128], strides = [1, 1, 1]} : vector<1x8x256xf32> to vector<1x8x128xf32>
      %49 = arith.truncf %48 : vector<1x8x128xf32> to vector<1x8x128xbf16>
      %50 = arith.index_cast %arg2 : i32 to index
      %c0_41 = arith.constant 0 : index
      %c0_42 = arith.constant 0 : index
      %c0_43 = arith.constant 0 : index
      %51 = vector.load %arg14[%50, %c0_41, %c0_42, %c0_43] : memref<1x1x8x128xbf16, #tpu.memory_space<vmem>>, vector<1x1x8x128xbf16>
      %52 = vector.shape_cast %51 : vector<1x1x8x128xbf16> to vector<1x8x128xbf16>
      %53 = vector.shape_cast %49 : vector<1x8x128xbf16> to vector<1x1x8x128xbf16>
      tpu.vector_store %arg14[%50, %c0_41, %c0_42, %c0_43], %53 {strides = array<i32>} : memref<1x1x8x128xbf16, #tpu.memory_space<vmem>>, vector<1x1x8x128xbf16>,
      %54 = vector.extract_strided_slice %47 {offsets = [0, 0, 128], sizes = [1, 8, 128], strides = [1, 1, 1]} : vector<1x8x256xf32> to vector<1x8x128xf32>
      %55 = arith.truncf %54 : vector<1x8x128xf32> to vector<1x8x128xbf16>
      %56 = arith.index_cast %arg2 : i32 to index
      %c0_44 = arith.constant 0 : index
      %c0_45 = arith.constant 0 : index
      %c0_46 = arith.constant 0 : index
      %57 = vector.load %arg15[%56, %c0_44, %c0_45, %c0_46] : memref<1x1x8x128xbf16, #tpu.memory_space<vmem>>, vector<1x1x8x128xbf16>
      %58 = vector.shape_cast %57 : vector<1x1x8x128xbf16> to vector<1x8x128xbf16>
      %59 = vector.shape_cast %55 : vector<1x8x128xbf16> to vector<1x1x8x128xbf16>
      tpu.vector_store %arg15[%56, %c0_44, %c0_45, %c0_46], %59 {strides = array<i32>} : memref<1x1x8x128xbf16, #tpu.memory_space<vmem>>, vector<1x1x8x128xbf16>,
    } else {
    }
    %c0_i32_1 = arith.constant 0 : i32
    %3 = arith.cmpi eq, %arg2, %c0_i32_1 : i32
    %4 = arith.extui %3 : i1 to i32
    %c0_i32_2 = arith.constant 0 : i32
    %5 = arith.cmpi ne, %4, %c0_i32_2 : i32
    scf.if %5 {
      %c0_33 = arith.constant 0 : index
      %c0_34 = arith.constant 0 : index
      %c0_35 = arith.constant 0 : index
      %39 = vector.load %arg3[%c0_33, %c0_34, %c0_35] : memref<1x8x32xf32, #tpu.memory_space<vmem>>, vector<1x8x32xf32>
      %40 = vector.shape_cast %39 : vector<1x8x32xf32> to vector<8x32xf32>
      %41 = arith.truncf %40 : vector<8x32xf32> to vector<8x32xbf16>
      %c0_36 = arith.constant 0 : index
      %c0_37 = arith.constant 0 : index
      %42 = vector.load %arg5[%c0_36, %c0_37] : memref<32x128xbf16, #tpu.memory_space<vmem>>, vector<32x128xbf16>
      %cst_38 = arith.constant dense<0.000000e+00> : vector<8x128xf32>
      %43 = tpu.matmul %41, %42, %cst_38 {dimension_numbers = #tpu.dot_dimension_numbers<[1], [0], [0], [1], [0, 0, 1, 1], [], []>} : vector<8x32xbf16>, vector<32x128xbf16>, vector<8x128xf32> -> vector<8x128xf32>
      %c0_39 = arith.constant 0 : index
      %c0_40 = arith.constant 0 : index
      %44 = vector.load %arg6[%c0_39, %c0_40] : memref<1x128xf32, #tpu.memory_space<vmem>>, vector<1x128xf32>
      %45 = vector.broadcast %44 : vector<1x128xf32> to vector<8x128xf32>
      %46 = arith.addf %43, %45 : vector<8x128xf32>
      %cst_41 = arith.constant 2.500000e-01 : f32
      %47 = vector.broadcast %cst_41 : f32 to vector<8x128xf32>
      %48 = arith.mulf %46, %47 : vector<8x128xf32>
      %49 = vector.shape_cast %48 : vector<8x128xf32> to vector<1x8x128xf32>
      %50 = arith.truncf %49 : vector<1x8x128xf32> to vector<1x8x128xbf16>
      %c0_42 = arith.constant 0 : index
      %c0_43 = arith.constant 0 : index
      %c0_44 = arith.constant 0 : index
      %51 = vector.load %arg10[%c0_42, %c0_43, %c0_44] : memref<1x8x128xbf16, #tpu.memory_space<vmem>>, vector<1x8x128xbf16>
      tpu.vector_store %arg10[%c0_42, %c0_43, %c0_44], %50 {strides = array<i32>} : memref<1x8x128xbf16, #tpu.memory_space<vmem>>, vector<1x8x128xbf16>,
      %cst_45 = arith.constant 0xFF800000 : f32
      %52 = vector.broadcast %cst_45 : f32 to vector<1x8x1xf32>
      %c0_46 = arith.constant 0 : index
      %c0_47 = arith.constant 0 : index
      %c0_48 = arith.constant 0 : index
      %53 = vector.load %arg11[%c0_46, %c0_47, %c0_48] : memref<1x8x1xf32, #tpu.memory_space<vmem>>, vector<1x8x1xf32>
      tpu.vector_store %arg11[%c0_46, %c0_47, %c0_48], %52 {strides = array<i32>} : memref<1x8x1xf32, #tpu.memory_space<vmem>>, vector<1x8x1xf32>,
      %cst_49 = arith.constant 0.000000e+00 : f32
      %54 = vector.broadcast %cst_49 : f32 to vector<1x8x1xf32>
      %c0_50 = arith.constant 0 : index
      %c0_51 = arith.constant 0 : index
      %c0_52 = arith.constant 0 : index
      %55 = vector.load %arg12[%c0_50, %c0_51, %c0_52] : memref<1x8x1xf32, #tpu.memory_space<vmem>>, vector<1x8x1xf32>
      tpu.vector_store %arg12[%c0_50, %c0_51, %c0_52], %54 {strides = array<i32>} : memref<1x8x1xf32, #tpu.memory_space<vmem>>, vector<1x8x1xf32>,
      %cst_53 = arith.constant 0.000000e+00 : f32
      %56 = vector.broadcast %cst_53 : f32 to vector<1x8x128xf32>
      %c0_54 = arith.constant 0 : index
      %c0_55 = arith.constant 0 : index
      %c0_56 = arith.constant 0 : index
      %57 = vector.load %arg13[%c0_54, %c0_55, %c0_56] : memref<1x8x128xf32, #tpu.memory_space<vmem>>, vector<1x8x128xf32>
      tpu.vector_store %arg13[%c0_54, %c0_55, %c0_56], %56 {strides = array<i32>} : memref<1x8x128xf32, #tpu.memory_space<vmem>>, vector<1x8x128xf32>,
    } else {
    }
    %6 = arith.index_cast %arg2 : i32 to index
    %c0 = arith.constant 0 : index
    %c0_3 = arith.constant 0 : index
    %c0_4 = arith.constant 0 : index
    %7 = vector.load %arg14[%6, %c0, %c0_3, %c0_4] : memref<1x1x8x128xbf16, #tpu.memory_space<vmem>>, vector<1x1x8x128xbf16>
    %8 = vector.shape_cast %7 : vector<1x1x8x128xbf16> to vector<1x8x128xbf16>
    %9 = arith.index_cast %arg2 : i32 to index
    %c0_5 = arith.constant 0 : index
    %c0_6 = arith.constant 0 : index
    %c0_7 = arith.constant 0 : index
    %10 = vector.load %arg15[%9, %c0_5, %c0_6, %c0_7] : memref<1x1x8x128xbf16, #tpu.memory_space<vmem>>, vector<1x1x8x128xbf16>
    %11 = vector.shape_cast %10 : vector<1x1x8x128xbf16> to vector<1x8x128xbf16>
    %c0_8 = arith.constant 0 : index
    %c0_9 = arith.constant 0 : index
    %c0_10 = arith.constant 0 : index
    %12 = vector.load %arg10[%c0_8, %c0_9, %c0_10] : memref<1x8x128xbf16, #tpu.memory_space<vmem>>, vector<1x8x128xbf16>
    %cst = arith.constant dense<0.000000e+00> : vector<1x8x8xf32>
    %13 = tpu.matmul %12, %8, %cst {dimension_numbers = #tpu.dot_dimension_numbers<[2], [2], [1], [1], [0, 0, 0, 1, 1, 1], [0], [0]>} : vector<1x8x128xbf16>, vector<1x8x128xbf16>, vector<1x8x8xf32> -> vector<1x8x8xf32>
    %c0_11 = arith.constant 0 : index
    %c0_12 = arith.constant 0 : index
    %c0_13 = arith.constant 0 : index
    %14 = vector.load %arg11[%c0_11, %c0_12, %c0_13] : memref<1x8x1xf32, #tpu.memory_space<vmem>>, vector<1x8x1xf32>
    %cst_14 = arith.constant dense<0xFF800000> : vector<1x8xf32>
    %15 = vector.multi_reduction <maximumf>, %13, %cst_14 [2] : vector<1x8x8xf32> to vector<1x8xf32>
    %16 = vector.shape_cast %15 : vector<1x8xf32> to vector<1x8x1xf32>
    %17 = arith.maximumf %14, %16 : vector<1x8x1xf32>
    %18 = arith.subf %14, %17 : vector<1x8x1xf32>
    %19 = math.exp %18 : vector<1x8x1xf32>
    %20 = vector.broadcast %17 : vector<1x8x1xf32> to vector<1x8x8xf32>
    %21 = arith.subf %13, %20 : vector<1x8x8xf32>
    %22 = math.exp %21 : vector<1x8x8xf32>
    %23 = arith.truncf %22 : vector<1x8x8xf32> to vector<1x8x8xbf16>
    %cst_15 = arith.constant dense<0.000000e+00> : vector<1x8x128xf32>
    %24 = tpu.matmul %23, %11, %cst_15 {dimension_numbers = #tpu.dot_dimension_numbers<[2], [1], [1], [2], [0, 0, 0, 1, 1, 2], [0], [0]>} : vector<1x8x8xbf16>, vector<1x8x128xbf16>, vector<1x8x128xf32> -> vector<1x8x128xf32>
    %25 = vector.extract_strided_slice %24 {offsets = [0, 0, 16], sizes = [1, 8, 1], strides = [1, 1, 1]} : vector<1x8x128xf32> to vector<1x8x1xf32>
    %c0_16 = arith.constant 0 : index
    %c0_17 = arith.constant 0 : index
    %c0_18 = arith.constant 0 : index
    %26 = vector.load %arg12[%c0_16, %c0_17, %c0_18] : memref<1x8x1xf32, #tpu.memory_space<vmem>>, vector<1x8x1xf32>
    %27 = arith.mulf %19, %26 : vector<1x8x1xf32>
    %28 = arith.addf %27, %25 : vector<1x8x1xf32>
    %c0_19 = arith.constant 0 : index
    %c0_20 = arith.constant 0 : index
    %c0_21 = arith.constant 0 : index
    %29 = vector.load %arg12[%c0_19, %c0_20, %c0_21] : memref<1x8x1xf32, #tpu.memory_space<vmem>>, vector<1x8x1xf32>
    tpu.vector_store %arg12[%c0_19, %c0_20, %c0_21], %28 {strides = array<i32>} : memref<1x8x1xf32, #tpu.memory_space<vmem>>, vector<1x8x1xf32>,
    %c0_22 = arith.constant 0 : index
    %c0_23 = arith.constant 0 : index
    %c0_24 = arith.constant 0 : index
    %30 = vector.load %arg13[%c0_22, %c0_23, %c0_24] : memref<1x8x128xf32, #tpu.memory_space<vmem>>, vector<1x8x128xf32>
    %31 = vector.broadcast %19 : vector<1x8x1xf32> to vector<1x8x128xf32>
    %32 = arith.mulf %31, %30 : vector<1x8x128xf32>
    %33 = arith.addf %32, %24 : vector<1x8x128xf32>
    %c0_25 = arith.constant 0 : index
    %c0_26 = arith.constant 0 : index
    %c0_27 = arith.constant 0 : index
    %34 = vector.load %arg13[%c0_25, %c0_26, %c0_27] : memref<1x8x128xf32, #tpu.memory_space<vmem>>, vector<1x8x128xf32>
    tpu.vector_store %arg13[%c0_25, %c0_26, %c0_27], %33 {strides = array<i32>} : memref<1x8x128xf32, #tpu.memory_space<vmem>>, vector<1x8x128xf32>,
    %c0_28 = arith.constant 0 : index
    %c0_29 = arith.constant 0 : index
    %c0_30 = arith.constant 0 : index
    %35 = vector.load %arg11[%c0_28, %c0_29, %c0_30] : memref<1x8x1xf32, #tpu.memory_space<vmem>>, vector<1x8x1xf32>
    tpu.vector_store %arg11[%c0_28, %c0_29, %c0_30], %17 {strides = array<i32>} : memref<1x8x1xf32, #tpu.memory_space<vmem>>, vector<1x8x1xf32>,
    %c0_i32_31 = arith.constant 0 : i32
    %36 = arith.cmpi eq, %arg2, %c0_i32_31 : i32
    %37 = arith.extui %36 : i1 to i32
    %c0_i32_32 = arith.constant 0 : i32
    %38 = arith.cmpi ne, %37, %c0_i32_32 : i32
    scf.if %38 {
      %c0_33 = arith.constant 0 : index
      %c0_34 = arith.constant 0 : index
      %c0_35 = arith.constant 0 : index
      %39 = vector.load %arg12[%c0_33, %c0_34, %c0_35] : memref<1x8x1xf32, #tpu.memory_space<vmem>>, vector<1x8x1xf32>
      %40 = tpu.reciprocal %39 {approx = true} : vector<1x8x1xf32> -> vector<1x8x1xf32>
      %c0_36 = arith.constant 0 : index
      %c0_37 = arith.constant 0 : index
      %c0_38 = arith.constant 0 : index
      %41 = vector.load %arg13[%c0_36, %c0_37, %c0_38] : memref<1x8x128xf32, #tpu.memory_space<vmem>>, vector<1x8x128xf32>
      %42 = vector.broadcast %40 : vector<1x8x1xf32> to vector<1x8x128xf32>
      %43 = arith.mulf %41, %42 : vector<1x8x128xf32>
      %c0_39 = arith.constant 0 : index
      %c0_40 = arith.constant 0 : index
      %c0_41 = arith.constant 0 : index
      %44 = vector.load %arg9[%c0_39, %c0_40, %c0_41] : memref<1x8x128xf32, #tpu.memory_space<vmem>>, vector<1x8x128xf32>
      tpu.vector_store %arg9[%c0_39, %c0_40, %c0_41], %43 {strides = array<i32>} : memref<1x8x128xf32, #tpu.memory_space<vmem>>, vector<1x8x128xf32>,
    } else {
    }
    return
  }
  func.func @transform_0(%arg0: i32, %arg1: i32, %arg2: i32) -> (i32, i32, i32) {
    %c0_i32 = arith.constant 0 : i32
    %c0_i32_0 = arith.constant 0 : i32
    return %arg0, %arg1, %c0_i32 : i32, i32, i32
  }
  func.func @transform_1(%arg0: i32, %arg1: i32, %arg2: i32) -> (i32, i32, i32) {
    %c1_i32 = arith.constant 1 : i32
    %0 = arith.subi %c1_i32, %arg1 : i32
    %c0_i32 = arith.constant 0 : i32
    %1 = arith.maxsi %0, %c0_i32 : i32
    %2 = arith.muli %arg2, %1 : i32
    %c0_i32_0 = arith.constant 0 : i32
    %c0_i32_1 = arith.constant 0 : i32
    return %arg0, %2, %c0_i32_0 : i32, i32, i32
  }
  func.func @transform_2(%arg0: i32, %arg1: i32, %arg2: i32) -> (i32, i32) {
    %c0_i32 = arith.constant 0 : i32
    %c0_i32_0 = arith.constant 0 : i32
    %c0_i32_1 = arith.constant 0 : i32
    return %c0_i32, %c0_i32_0 : i32, i32
  }
  func.func @transform_3(%arg0: i32, %arg1: i32, %arg2: i32) -> (i32, i32) {
    %c0_i32 = arith.constant 0 : i32
    %c0_i32_0 = arith.constant 0 : i32
    %c0_i32_1 = arith.constant 0 : i32
    return %c0_i32, %c0_i32_0 : i32, i32
  }
  func.func @transform_4(%arg0: i32, %arg1: i32, %arg2: i32) -> (i32, i32) {
    %c0_i32 = arith.constant 0 : i32
    %c0_i32_0 = arith.constant 0 : i32
    %c0_i32_1 = arith.constant 0 : i32
    return %c0_i32, %c0_i32_0 : i32, i32
  }
  func.func @transform_5(%arg0: i32, %arg1: i32, %arg2: i32) -> (i32, i32) {
    %c0_i32 = arith.constant 0 : i32
    %c0_i32_0 = arith.constant 0 : i32
    %c0_i32_1 = arith.constant 0 : i32
    return %c0_i32, %c0_i32_0 : i32, i32
  }
  func.func @transform_6(%arg0: i32, %arg1: i32, %arg2: i32) -> (i32, i32, i32) {
    %c0_i32 = arith.constant 0 : i32
    %c0_i32_0 = arith.constant 0 : i32
    return %arg0, %arg1, %c0_i32 : i32, i32, i32
  }
}

</mosaic_0001>

<llo_original>
// kernel: tpu_custom_call.1
$region0: #{tpu_custom_call.1}
  #allocation0 [shape = 'u32[]', space=smem, size = 0x4, offset = 0x4, fixed_abs, tag = 'smem constant byte address 0x4 - core index']
  #allocation1 [shape = 'u32[72,128]{1,0:T(1,128)}', space=vmem, size = 0x9000, scoped, tag = 'internal scratch']
  #allocation2 [shape = 'bf16[1,8,128]{2,1,0:T(8,128)(2,1)}', space=vmem, size = 0x800, scoped, tag = 'scratch operand']
  #allocation3 [shape = 'f32[1,8,1]{2,1,0:T(8,128)}', space=vmem, size = 0x1000, scoped, tag = 'scratch operand']
  #allocation4 [shape = 'f32[1,8,1]{2,1,0:T(8,128)}', space=vmem, size = 0x1000, scoped, tag = 'scratch operand']
  #allocation5 [shape = 'f32[1,8,128]{2,1,0:T(8,128)}', space=vmem, size = 0x1000, scoped, tag = 'scratch operand']
  #allocation6 [shape = 'bf16[1,1,8,128]{3,2,1,0:T(8,128)(2,1)}', space=vmem, size = 0x800, scoped, tag = 'scratch operand']
  #allocation7 [shape = 'bf16[1,1,8,128]{3,2,1,0:T(8,128)(2,1)}', space=vmem, size = 0x800, scoped, tag = 'scratch operand']
  %s0 = inlined_call_operand.hbm [shape: f32[2,8,32], index: 0, kind: input, shape index: {}]
  %s1 = inlined_call_operand.hbm [shape: f32[2,8,32], index: 1, kind: input, shape index: {}]
  %s2 = inlined_call_operand.hbm [shape: bf16[32,128], index: 2, kind: input, shape index: {}]
  %s3 = inlined_call_operand.vmem [shape: f32[1,128], index: 3, kind: input, shape index: {}]
  %s4 = inlined_call_operand.hbm [shape: bf16[32,256], index: 4, kind: input, shape index: {}]
  %s5 = inlined_call_operand.vmem [shape: f32[1,256], index: 5, kind: input, shape index: {}]
  %s6 = inlined_call_operand.hbm [shape: f32[2,8,128], index: 6, kind: output, shape index: {}]
  %s7 = sld [smem:[#allocation0]]
  $region85: #{tpu_custom_call.1} parent=0
    _
  %s9 = ssub.s32 1, %s7
  %s10 = scalar_select 0, %s9, %s7
  $region1: #{tpu_custom_call.1} parent=0
    #allocation8 [shape = 'u8[8192]{0}', space=vmem, size = 0x2000, scoped, tag = 'input window, operand 0']
    #allocation9 [shape = 's32[2]{0}', space=sflag, size = 0x8, scoped, tag = 'scoped memory for tpu_custom_call.1']
    #allocation10 [shape = 's32[2]{0}', space=sflag, size = 0x8, scoped, tag = 'scoped memory for tpu_custom_call.1']
    #allocation11 [shape = 'u8[8192]{0}', space=vmem, size = 0x2000, scoped, tag = 'input window, operand 1']
    #allocation12 [shape = 's32[2]{0}', space=sflag, size = 0x8, scoped, tag = 'scoped memory for tpu_custom_call.1']
    #allocation13 [shape = 'u8[8192]{0}', space=vmem, size = 0x2000, scoped, tag = 'input window, operand 2, single buffered']
    #allocation14 [shape = 'u8[16384]{0}', space=vmem, size = 0x4000, scoped, tag = 'input window, operand 4, single buffered']
    #allocation15 [shape = 's32[1]{0}', space=sflag, size = 0x4, scoped, tag = 'scoped memory for tpu_custom_call.1']
    #allocation16 [shape = 'u8[8192]{0}', space=vmem, size = 0x2000, scoped, tag = 'output window, operand 0']
    %11 = vsyncpa [#allocation9], 0
    %s12 = scalar_lea.sflag [#allocation9], 1
    %13 = vsyncpa %s12, 0
    %14 = vsyncpa [#allocation12], 0
    %s15 = scalar_lea.sflag [#allocation12], 1
    %16 = vsyncpa %s15, 0
    %17 = vsyncpa [#allocation15], 0
    %18 = vsyncpa [#allocation10], 0
    %s19 = scalar_lea.sflag [#allocation10], 1
    %20 = vsyncpa %s19, 0
    loop: start=0, step=1, limit=4
    $region2: #{tpu_custom_call.1} parent=1 // loop_pre_header
      _
    $region3: #{tpu_custom_call.1} parent=1 // loop_header
      %s22 = sphi 0, %s26
      %p23 = scmp.ge.s32.totalorder %s22, 4
      %s29 = sphi 0, %s48
      %s30 = sphi 0, %s44
      %s31 = sphi 0, %s40
      %s32 = sphi 0, %s29
      %s33 = sphi 0, %s30
      %s34 = sphi 0, %s31
      %s35 = sphi 0, %s32
      %s36 = sphi 0, %s33
      %s37 = sphi 0, %s34
      %s53 = sphi 0, %s55
      %s56 = sphi 0, %s53
      %s57 = sphi 0, %s56
      %s73 = sphi 0, %s57
      %s89 = sphi 0, %s91
      %s92 = sphi 0, %s89
      %s93 = sphi 0, %s92
      %s109 = sphi 0, %s93
      %s113 = sphi 0, %s113
      %s115 = sphi 0, %s113
      %s116 = sphi 0, %s115
      %s130 = sphi 0, %s116
      %s134 = sphi 0, %s134
      %s136 = sphi 0, %s134
      %s137 = sphi 0, %s136
      %s151 = sphi 0, %s137
      %s155 = sphi 0, %s155
      %s157 = sphi 0, %s155
      %s158 = sphi 0, %s157
      %s172 = sphi 0, %s158
      %s176 = sphi 0, %s176
      %s178 = sphi 0, %s176
      %s179 = sphi 0, %s178
      %s193 = sphi 0, %s179
      %s201 = sphi 0, %s203
      %s204 = sphi 0, %s201
      %s205 = sphi 0, %s204
      %s221 = sphi 0, %s205
    $region4: #{tpu_custom_call.1} parent=1 // loop_header_branch
      %25 = sbr.rel (%p23) target = $region8
    $region5: #{tpu_custom_call.1} parent=1 // loop_body
      %s27 = ssub.s32 %s22, 1
      %s28 = ssub.s32 %s22, 2
      %s38 = sadd.s32 1, %s31
      %p39 = scmp.ge.s32.totalorder %s38, 1
      %s40 = scalar_select %p39, 0, %s38
      %s41 = sadd.s32 1, %s30
      %s42 = scalar_select %p39, %s41, %s30
      %p43 = scmp.ge.s32.totalorder %s42, 1
      %s44 = scalar_select %p43, 0, %s42
      %s45 = sadd.s32 1, %s29
      %s46 = scalar_select %p43, %s45, %s29
      %p47 = scmp.ge.s32.totalorder %s46, 2
      %s48 = scalar_select %p47, 0, %s46
      %s49 = ssub.s32 %s29, %s48
      %s50 = ssub.s32 %s30, %s44
      %s51 = sor.u32 %s49, %s50
      %p52 = scmp.eq.s32.totalorder %s51, 0
      %s54 = sadd.s32 %s53, 1
      %s55 = scalar_select %p52, %s53, %s54
      %p58 = pneg %p52
      %p59 = scmp.eq.s32.totalorder %s22, 1
      %p60 = por %p58, %p59
      %p61 = scmp.ne.s32.totalorder %s53, %s56
      %p62 = scmp.eq.s32.totalorder %s22, 0
      %p63 = por %p61, %p62
      %p64 = scmp.ne.s32.totalorder %s53, %s56
      %p65 = scmp.eq.s32.totalorder %s27, 1
      %p66 = por %p64, %p65
      %p67 = scmp.ne.s32.totalorder %s56, %s57
      %p68 = scmp.eq.s32.totalorder %s27, 0
      %p69 = por %p67, %p68
      %p70 = scmp.ne.s32.totalorder %s56, %s57
      %p71 = scmp.eq.s32.totalorder %s28, 1
      %p72 = por %p70, %p71
      %p74 = scmp.ne.s32.totalorder %s57, %s73
      %p75 = scmp.eq.s32.totalorder %s28, 0
      %p76 = por %p74, %p75
      %s77 = ssub.s32 1, %s30
      %p78 = scmp.gt.s32.totalorder %s77, 0
      %s79 = scalar_select %p78, %s77, 0
      %s80 = smul.u32 %s31, %s79
      %s81 = ssub.s32 1, %s44
      %p82 = scmp.gt.s32.totalorder %s81, 0
      %s83 = scalar_select %p82, %s81, 0
      %s84 = smul.u32 %s40, %s83
      %s85 = ssub.s32 %s29, %s48
      %s86 = ssub.s32 %s80, %s84
      %s87 = sor.u32 %s85, %s86
      %p88 = scmp.eq.s32.totalorder %s87, 0
      %s90 = sadd.s32 %s89, 1
      %s91 = scalar_select %p88, %s89, %s90
      %p94 = pneg %p88
      %p95 = scmp.eq.s32.totalorder %s22, 1
      %p96 = por %p94, %p95
      %p97 = scmp.ne.s32.totalorder %s89, %s92
      %p98 = scmp.eq.s32.totalorder %s22, 0
      %p99 = por %p97, %p98
      %p100 = scmp.ne.s32.totalorder %s89, %s92
      %p101 = scmp.eq.s32.totalorder %s27, 1
      %p102 = por %p100, %p101
      %p103 = scmp.ne.s32.totalorder %s92, %s93
      %p104 = scmp.eq.s32.totalorder %s27, 0
      %p105 = por %p103, %p104
      %p106 = scmp.ne.s32.totalorder %s92, %s93
      %p107 = scmp.eq.s32.totalorder %s28, 1
      %p108 = por %p106, %p107
      %p110 = scmp.ne.s32.totalorder %s93, %s109
      %p111 = scmp.eq.s32.totalorder %s28, 0
      %p112 = por %p110, %p111
      %s114 = sadd.s32 %s113, 1
      %p117 = scmp.eq.s32.totalorder %s22, 1
      %p118 = scmp.ne.s32.totalorder %s113, %s115
      %p119 = scmp.eq.s32.totalorder %s22, 0
      %p120 = por %p118, %p119
      %p121 = scmp.ne.s32.totalorder %s113, %s115
      %p122 = scmp.eq.s32.totalorder %s27, 1
      %p123 = por %p121, %p122
      %p124 = scmp.ne.s32.totalorder %s115, %s116
      %p125 = scmp.eq.s32.totalorder %s27, 0
      %p126 = por %p124, %p125
      %p127 = scmp.ne.s32.totalorder %s115, %s116
      %p128 = scmp.eq.s32.totalorder %s28, 1
      %p129 = por %p127, %p128
      %p131 = scmp.ne.s32.totalorder %s116, %s130
      %p132 = scmp.eq.s32.totalorder %s28, 0
      %p133 = por %p131, %p132
      %s135 = sadd.s32 %s134, 1
      %p138 = scmp.eq.s32.totalorder %s22, 1
      %p139 = scmp.ne.s32.totalorder %s134, %s136
      %p140 = scmp.eq.s32.totalorder %s22, 0
      %p141 = por %p139, %p140
      %p142 = scmp.ne.s32.totalorder %s134, %s136
      %p143 = scmp.eq.s32.totalorder %s27, 1
      %p144 = por %p142, %p143
      %p145 = scmp.ne.s32.totalorder %s136, %s137
      %p146 = scmp.eq.s32.totalorder %s27, 0
      %p147 = por %p145, %p146
      %p148 = scmp.ne.s32.totalorder %s136, %s137
      %p149 = scmp.eq.s32.totalorder %s28, 1
      %p150 = por %p148, %p149
      %p152 = scmp.ne.s32.totalorder %s137, %s151
      %p153 = scmp.eq.s32.totalorder %s28, 0
      %p154 = por %p152, %p153
      %s156 = sadd.s32 %s155, 1
      %p159 = scmp.eq.s32.totalorder %s22, 1
      %p160 = scmp.ne.s32.totalorder %s155, %s157
      %p161 = scmp.eq.s32.totalorder %s22, 0
      %p162 = por %p160, %p161
      %p163 = scmp.ne.s32.totalorder %s155, %s157
      %p164 = scmp.eq.s32.totalorder %s27, 1
      %p165 = por %p163, %p164
      %p166 = scmp.ne.s32.totalorder %s157, %s158
      %p167 = scmp.eq.s32.totalorder %s27, 0
      %p168 = por %p166, %p167
      %p169 = scmp.ne.s32.totalorder %s157, %s158
      %p170 = scmp.eq.s32.totalorder %s28, 1
      %p171 = por %p169, %p170
      %p173 = scmp.ne.s32.totalorder %s158, %s172
      %p174 = scmp.eq.s32.totalorder %s28, 0
      %p175 = por %p173, %p174
      %s177 = sadd.s32 %s176, 1
      %p180 = scmp.eq.s32.totalorder %s22, 1
      %p181 = scmp.ne.s32.totalorder %s176, %s178
      %p182 = scmp.eq.s32.totalorder %s22, 0
      %p183 = por %p181, %p182
      %p184 = scmp.ne.s32.totalorder %s176, %s178
      %p185 = scmp.eq.s32.totalorder %s27, 1
      %p186 = por %p184, %p185
      %p187 = scmp.ne.s32.totalorder %s178, %s179
      %p188 = scmp.eq.s32.totalorder %s27, 0
      %p189 = por %p187, %p188
      %p190 = scmp.ne.s32.totalorder %s178, %s179
      %p191 = scmp.eq.s32.totalorder %s28, 1
      %p192 = por %p190, %p191
      %p194 = scmp.ne.s32.totalorder %s179, %s193
      %p195 = scmp.eq.s32.totalorder %s28, 0
      %p196 = por %p194, %p195
      %s197 = ssub.s32 %s29, %s48
      %s198 = ssub.s32 %s30, %s44
      %s199 = sor.u32 %s197, %s198
      %p200 = scmp.eq.s32.totalorder %s199, 0
      %s202 = sadd.s32 %s201, 1
      %s203 = scalar_select %p200, %s201, %s202
      %p206 = pneg %p200
      %p207 = scmp.eq.s32.totalorder %s22, 1
      %p208 = por %p206, %p207
      %p209 = scmp.ne.s32.totalorder %s201, %s204
      %p210 = scmp.eq.s32.totalorder %s22, 0
      %p211 = por %p209, %p210
      %p212 = scmp.ne.s32.totalorder %s201, %s204
      %p213 = scmp.eq.s32.totalorder %s27, 1
      %p214 = por %p212, %p213
      %p215 = scmp.ne.s32.totalorder %s204, %s205
      %p216 = scmp.eq.s32.totalorder %s27, 0
      %p217 = por %p215, %p216
      %p218 = scmp.ne.s32.totalorder %s204, %s205
      %p219 = scmp.eq.s32.totalorder %s28, 1
      %p220 = por %p218, %p219
      %p222 = scmp.ne.s32.totalorder %s205, %s221
      %p223 = scmp.eq.s32.totalorder %s28, 0
      %p224 = por %p222, %p223
      %p225 = scmp.le.s32.totalorder 1, %s22
      %p226 = scmp.lt.s32.totalorder %s22, 3
      %p227 = pnand %p225, %p226
      %p228 = pneg %p227
      // Predicated region
      $region9: #{tpu_custom_call.1} parent=5 // pred_check
        _
      $region10: #{tpu_custom_call.1} parent=5 // pred_check_branch
        %230 = sbr.rel (%p227) target = $region12
      $region11: #{tpu_custom_call.1} parent=5 // pred_region
        %s231 = ssub.s32 %s22, 1
        // Predicated region
        $region13: #{tpu_custom_call.1} parent=11 // pred_check
          %p232 = pneg %p126
        $region14: #{tpu_custom_call.1} parent=11 // pred_check_branch
          %234 = sbr.rel (%p232) target = $region16
        $region15: #{tpu_custom_call.1} parent=11 // pred_region
          %236 = vsyncadd [#allocation12], 0
          %s237 = sshll.u32 %s2, 4
          %s238 = int_to_ptr.hbm [resolvable:$true] %s237
          %s239 = sshll.u32 [#allocation13], 4
          %s240 = int_to_ptr.vmem [resolvable:$true] %s239
          %245 = dma.hbm_to_vmem [thread:$0]  %s238, 256, %s240, [#allocation12], 64, 64, 4
        $region16: #{tpu_custom_call.1} parent=11 // pred_fallthru
          _
        // Predicated region
        $region17: #{tpu_custom_call.1} parent=11 // pred_check
          %p246 = pneg %p147
        $region18: #{tpu_custom_call.1} parent=11 // pred_check_branch
          %248 = sbr.rel (%p246) target = $region20
        $region19: #{tpu_custom_call.1} parent=11 // pred_region
          _
        $region20: #{tpu_custom_call.1} parent=11 // pred_fallthru
          _
        // Predicated region
        $region21: #{tpu_custom_call.1} parent=11 // pred_check
          %p249 = pneg %p168
        $region22: #{tpu_custom_call.1} parent=11 // pred_check_branch
          %251 = sbr.rel (%p249) target = $region24
        $region23: #{tpu_custom_call.1} parent=11 // pred_region
          %253 = vsyncadd [#allocation15], 0
          %s254 = sshll.u32 %s4, 4
          %s255 = int_to_ptr.hbm [resolvable:$true] %s254
          %s256 = sshll.u32 [#allocation14], 4
          %s257 = int_to_ptr.vmem [resolvable:$true] %s256
          %262 = dma.hbm_to_vmem [thread:$0]  %s255, 512, %s257, [#allocation15], 128, 128, 8
        $region24: #{tpu_custom_call.1} parent=11 // pred_fallthru
          _
        // Predicated region
        $region25: #{tpu_custom_call.1} parent=11 // pred_check
          %p263 = pneg %p189
        $region26: #{tpu_custom_call.1} parent=11 // pred_check_branch
          %265 = sbr.rel (%p263) target = $region28
        $region27: #{tpu_custom_call.1} parent=11 // pred_region
          _
        $region28: #{tpu_custom_call.1} parent=11 // pred_fallthru
          _
      $region12: #{tpu_custom_call.1} parent=5 // pred_fallthru
        _
      %p266 = scmp.lt.s32.totalorder %s22, 2
      // Predicated region
      $region29: #{tpu_custom_call.1} parent=5 // pred_check
        %p267 = pneg %p266
      $region30: #{tpu_custom_call.1} parent=5 // pred_check_branch
        %269 = sbr.rel (%p267) target = $region32
      $region31: #{tpu_custom_call.1} parent=5 // pred_region
        // Predicated region
        $region33: #{tpu_custom_call.1} parent=31 // pred_check
          %p270 = pneg %p63
        $region34: #{tpu_custom_call.1} parent=31 // pred_check_branch
          %272 = sbr.rel (%p270) target = $region36
        $region35: #{tpu_custom_call.1} parent=31 // pred_region
          %s273 = sand.u32 %s53, 1
          %s274 = scalar_lea.sflag [#allocation9], %s273
          %s275 = sand.u32 %s53, 1
          %s276 = smul.addr %s275, 8
          %s277 = scalar_lea.vmem [#allocation8], %s276
          %279 = vsyncadd %s274, 0
          %s280 = sadd.s32 %s30, %s29
          %s281 = smul.addr %s280, 8
          %s282 = scalar_lea.hbm %s0, %s281
          %s284 = sshll.u32 %s282, 4
          %s285 = int_to_ptr.hbm [resolvable:$true] %s284
          %s286 = sshll.u32 %s277, 4
          %s287 = int_to_ptr.vmem [resolvable:$true] %s286
          %289 = dma.hbm_to_vmem [thread:$0]  %s285, 128, %s287, %s274
        $region36: #{tpu_custom_call.1} parent=31 // pred_fallthru
          _
        // Predicated region
        $region37: #{tpu_custom_call.1} parent=31 // pred_check
          %p290 = pneg %p99
        $region38: #{tpu_custom_call.1} parent=31 // pred_check_branch
          %292 = sbr.rel (%p290) target = $region40
        $region39: #{tpu_custom_call.1} parent=31 // pred_region
          %s293 = sand.u32 %s22, 1
          %s294 = scalar_lea.sflag [#allocation12], %s293
          %s295 = sand.u32 %s89, 1
          %s296 = smul.addr %s295, 8
          %s297 = scalar_lea.vmem [#allocation11], %s296
          %s298 = ssub.s32 1, %s30
          %p299 = scmp.gt.s32.totalorder %s298, 0
          %s300 = scalar_select %p299, %s298, 0
          %s301 = smul.u32 %s31, %s300
          %303 = vsyncadd %s294, 0
          %s304 = sadd.s32 %s301, %s29
          %s305 = smul.addr %s304, 8
          %s306 = scalar_lea.hbm %s1, %s305
          %s308 = sshll.u32 %s306, 4
          %s309 = int_to_ptr.hbm [resolvable:$true] %s308
          %s310 = sshll.u32 %s297, 4
          %s311 = int_to_ptr.vmem [resolvable:$true] %s310
          %313 = dma.hbm_to_vmem [thread:$0]  %s309, 128, %s311, %s294
        $region40: #{tpu_custom_call.1} parent=31 // pred_fallthru
          _
      $region32: #{tpu_custom_call.1} parent=5 // pred_fallthru
        _
      %p314 = scmp.le.s32.totalorder 1, %s22
      %p315 = scmp.lt.s32.totalorder %s22, 3
      %p316 = pnand %p314, %p315
      %p317 = pneg %p316
      // Predicated region
      $region41: #{tpu_custom_call.1} parent=5 // pred_check
        _
      $region42: #{tpu_custom_call.1} parent=5 // pred_check_branch
        %319 = sbr.rel (%p316) target = $region44
      $region43: #{tpu_custom_call.1} parent=5 // pred_region
        %s320 = ssub.s32 %s22, 1
        %s321 = sand.u32 %s56, 1
        %s322 = scalar_lea.sflag [#allocation9], %s321
        %s323 = sand.u32 %s56, 1
        %s324 = smul.addr %s323, 8
        %s325 = scalar_lea.vmem [#allocation8], %s324
        // Predicated region
        $region45: #{tpu_custom_call.1} parent=43 // pred_check
          %p326 = pneg %p69
        $region46: #{tpu_custom_call.1} parent=43 // pred_check_branch
          %328 = sbr.rel (%p326) target = $region48
        $region47: #{tpu_custom_call.1} parent=43 // pred_region
          %330 = dma.done %s322, 128
        $region48: #{tpu_custom_call.1} parent=43 // pred_fallthru
          _
        %s331 = sand.u32 %s27, 1
        %s332 = scalar_lea.sflag [#allocation12], %s331
        %s333 = sand.u32 %s92, 1
        %s334 = smul.addr %s333, 8
        %s335 = scalar_lea.vmem [#allocation11], %s334
        // Predicated region
        $region49: #{tpu_custom_call.1} parent=43 // pred_check
          %p336 = pneg %p105
        $region50: #{tpu_custom_call.1} parent=43 // pred_check_branch
          %338 = sbr.rel (%p336) target = $region52
        $region51: #{tpu_custom_call.1} parent=43 // pred_region
          %340 = dma.done %s332, 128
        $region52: #{tpu_custom_call.1} parent=43 // pred_fallthru
          _
        // Predicated region
        $region53: #{tpu_custom_call.1} parent=43 // pred_check
          %p341 = pneg %p126
        $region54: #{tpu_custom_call.1} parent=43 // pred_check_branch
          %343 = sbr.rel (%p341) target = $region56
        $region55: #{tpu_custom_call.1} parent=43 // pred_region
          %345 = dma.done [#allocation12], 256
        $region56: #{tpu_custom_call.1} parent=43 // pred_fallthru
          _
        // Predicated region
        $region57: #{tpu_custom_call.1} parent=43 // pred_check
          %p346 = pneg %p168
        $region58: #{tpu_custom_call.1} parent=43 // pred_check_branch
          %348 = sbr.rel (%p346) target = $region60
        $region59: #{tpu_custom_call.1} parent=43 // pred_region
          %350 = dma.done [#allocation15], 512
        $region60: #{tpu_custom_call.1} parent=43 // pred_fallthru
          _
        %s351 = sand.u32 %s56, 1
        %s352 = scalar_lea.sflag [#allocation9], %s351
        %s353 = sand.u32 %s56, 1
        %s354 = smul.addr %s353, 8
        %s355 = scalar_lea.vmem [#allocation8], %s354
        %p356 = pneg %p69
        %p357 = pneg %p66
        %s358 = sand.u32 %s27, 1
        %s359 = scalar_lea.sflag [#allocation12], %s358
        %s360 = sand.u32 %s92, 1
        %s361 = smul.addr %s360, 8
        %s362 = scalar_lea.vmem [#allocation11], %s361
        %p363 = pneg %p105
        %p364 = pneg %p102
        %p365 = pneg %p126
        %p366 = pneg %p123
        %p367 = pneg %p147
        %p368 = pneg %p144
        %p369 = pneg %p168
        %p370 = pneg %p165
        %p371 = pneg %p189
        %p372 = pneg %p186
        %p373 = pneg %p217
        %p374 = pneg %p214
        %s375 = sand.u32 %s204, 1
        %s376 = scalar_lea.sflag [#allocation10], %s375
        %s377 = sand.u32 %s204, 1
        %s378 = smul.addr %s377, 8
        %s379 = scalar_lea.vmem [#allocation16], %s378
        %s380 = ssub.s32 1, %s33
        %p381 = scmp.gt.s32.totalorder %s380, 0
        %s382 = scalar_select %p381, %s380, 0
        %s383 = smul.u32 %s34, %s382
        %p385 = scmp.eq.s32.totalorder %s33, 0
        // Predicated region
        $region61: #{tpu_custom_call.1} parent=43 // pred_check
          %p386 = pneg %p385
        $region62: #{tpu_custom_call.1} parent=43 // pred_check_branch
          %388 = sbr.rel (%p386) target = $region64
        $region63: #{tpu_custom_call.1} parent=43 // pred_region
          %v389 = vld [vmem:[%s335] sm:$0xff]
          %v390 = vpack.c.bf16 %v389, %v389
          %v391 = vld [vmem:[#allocation14] sm:$0xff]
          %v392 = vld [vmem:[#allocation14 + $0x8] sm:$0xff]
          %v393 = vld [vmem:[#allocation14 + $0x10] sm:$0xff]
          %v394 = vld [vmem:[#allocation14 + $0x18] sm:$0xff]
          %v395 = vld [vmem:[%s5] sm:$0x3]
          %v397 = vperm.slane %v395, 0
          %v398 = vperm.slane %v395, 1
          %v405 = vunpack.c.l.b16 %v391
          %v406 = vunpack.c.h.b16 %v391
          %v407 = vunpack.c.l.b16 %v392
          %v408 = vunpack.c.h.b16 %v392
          %v409 = vunpack.c.l.b16 %v393
          %v410 = vunpack.c.h.b16 %v393
          %v411 = vunpack.c.l.b16 %v394
          %v412 = vunpack.c.h.b16 %v394
          %v413 = vpack.c.b16 %v407, %v405
          %v414 = vpack.c.b16 %v408, %v406
          %v415 = vpack.c.b16 %v411, %v409
          %v416 = vpack.c.b16 %v412, %v410
          %vm421 = vcmask 261120
          %v423 = vsel %vm421, %v390, 0
          %425 = vmatpush.bf16.msra.mxu0 0
          %426 = vmatpush.bf16.msra.mxu0 0
          %427 = vmatpush.bf16.msra.mxu0 0
          %428 = vmatpush.bf16.msra.mxu0 0
          %429 = vmatpush.bf16.msra.mxu0 0
          %430 = vmatpush.bf16.msra.mxu0 0
          %431 = vmatpush.bf16.msra.mxu0 %v415
          %432 = vmatpush.bf16.msra.mxu0 %v413
          %433 = vmatmul.bf16.gmra.mxu0 %v423
          %v434 = vpop.f32.mrf.mxu0
          %v435 = vadd.f32 %v397, %v434
          %v436 = vpop.f32.mrf.mxu0
          %437 = vdwg.mxu0
          %438 = vmatpush.bf16.msra.mxu0 0
          %439 = vmatpush.bf16.msra.mxu0 0
          %440 = vmatpush.bf16.msra.mxu0 0
          %441 = vmatpush.bf16.msra.mxu0 0
          %442 = vmatpush.bf16.msra.mxu0 0
          %443 = vmatpush.bf16.msra.mxu0 0
          %444 = vmatpush.bf16.msra.mxu0 %v416
          %445 = vmatpush.bf16.msra.mxu0 %v414
          %446 = vmatmul.bf16.gmra.mxu0 %v423
          %v447 = vpop.f32.mrf.mxu0
          %v448 = vadd.f32 %v398, %v447
          %v449 = vpop.f32.mrf.mxu0
          %450 = vdwg.mxu0
          %v451 = vpack.c.bf16 %v435, %v435
          %s452 = smul.addr %s34, 4
          %s453 = scalar_lea.vmem [#allocation6], %s452
          %454 = vst [vmem:[%s453] sm:$0xf] %v451
          %v455 = vpack.c.bf16 %v448, %v448
          %s456 = smul.addr %s34, 4
          %s457 = scalar_lea.vmem [#allocation7], %s456
          %458 = vst [vmem:[%s457] sm:$0xf] %v455
        $region64: #{tpu_custom_call.1} parent=43 // pred_fallthru
          _
        %p459 = scmp.eq.s32.totalorder %s34, 0
        // Predicated region
        $region65: #{tpu_custom_call.1} parent=43 // pred_check
          %p460 = pneg %p459
        $region66: #{tpu_custom_call.1} parent=43 // pred_check_branch
          %462 = sbr.rel (%p460) target = $region68
        $region67: #{tpu_custom_call.1} parent=43 // pred_region
          %v463 = vld [vmem:[%s325] sm:$0xff]
          %v464 = vpack.c.bf16 %v463, %v463
          %v465 = vld [vmem:[#allocation13] sm:$0xf]
          %v466 = vld [vmem:[#allocation13 + $0x4] sm:$0xf]
          %v467 = vld [vmem:[#allocation13 + $0x8] sm:$0xf]
          %v468 = vld [vmem:[#allocation13 + $0xc] sm:$0xf]
          %v469 = vld [vmem:[%s3] sm:$0x1]
          %v471 = vperm.slane %v469, 0
          %v477 = vunpack.c.l.b16 %v465
          %v478 = vunpack.c.l.b16 %v466
          %v479 = vunpack.c.l.b16 %v467
          %v480 = vunpack.c.l.b16 %v468
          %v481 = vpack.c.b16 %v478, %v477
          %v482 = vpack.c.b16 %v480, %v479
          %vm485 = vcmask 261120
          %v487 = vsel %vm485, %v464, 0
          %489 = vmatpush.bf16.msra.mxu0 0
          %490 = vmatpush.bf16.msra.mxu0 0
          %491 = vmatpush.bf16.msra.mxu0 0
          %492 = vmatpush.bf16.msra.mxu0 0
          %493 = vmatpush.bf16.msra.mxu0 0
          %494 = vmatpush.bf16.msra.mxu0 0
          %495 = vmatpush.bf16.msra.mxu0 %v482
          %496 = vmatpush.bf16.msra.mxu0 %v481
          %497 = vmatmul.bf16.gmra.mxu0 %v487
          %v498 = vpop.f32.mrf.mxu0
          %v499 = vadd.f32 %v471, %v498
          %v500 = vpop.f32.mrf.mxu0
          %501 = vdwg.mxu0
          %v502 = vmul.f32 %v499, 0.25
          %v503 = vpack.c.bf16 %v502, %v502
          %504 = vst [vmem:[#allocation2] sm:$0xf] %v503
          %vm505 = vcmask 7168
          %506 = vst.msk [vmem:[#allocation3] sm:$0xff] %vm505, -inf
          %507 = vst.msk [vmem:[#allocation4] sm:$0xff] %vm505, 0.0
          %508 = vst [vmem:[#allocation5] sm:$0xff] 0.0
        $region68: #{tpu_custom_call.1} parent=43 // pred_fallthru
          _
        %s509 = smul.addr %s34, 4
        %s510 = scalar_lea.vmem [#allocation6], %s509
        %v511 = vld [vmem:[%s510] sm:$0xf]
        %s512 = smul.addr %s34, 4
        %s513 = scalar_lea.vmem [#allocation7], %s512
        %v514 = vld [vmem:[%s513] sm:$0xf]
        %v515 = vld [vmem:[#allocation2] sm:$0xf]
        %516 = vmatpush.bf16.xpose.msra.mxu0 0
        %517 = vmatpush.bf16.xpose.msra.mxu0 0
        %518 = vmatpush.bf16.xpose.msra.mxu0 0
        %519 = vmatpush.bf16.xpose.msra.mxu0 0
        %520 = vmatpush.bf16.xpose.msra.mxu0 0
        %521 = vmatpush.bf16.xpose.msra.mxu0 0
        %522 = vmatpush.bf16.xpose.msra.mxu0 0
        %523 = vmatpush.bf16.xpose.msra.mxu0 %v511
        %524 = vmatmul.bf16.gmra.mxu0 %v515
        %v525 = vpop.f32.mrf.mxu0
        %v526 = vadd.f32 0.0, %v525
        %v527 = vpop.f32.mrf.mxu0
        %528 = vdwg.mxu0
        %v529 = vld [vmem:[#allocation3] sm:$0xff]
        %vm530 = vcmask 64512
        %v531 = vsel %vm530, %v526, -inf
        %532 = vmax.xlane.f32.xlu0 %v531
        %v533 = vpop.xlane.xlu0 %532
        %v534 = vmax.f32 %v529, %v533
        %v535 = vsub.f32 %v529, %v534
        %v536 = vmul.f32 %v535, 1.442695
        %v537 = vpow.pop %v536
        %539 = vset.pattern.permute.xlu0 0
        %540 = vperm.xlu0 %539, %v534
        %v541 = vpop.permute.xlu0 %540
        %v543 = vsub.f32 %v526, %v541
        %v544 = vmul.f32 %v543, 1.442695
        %v545 = vpow.pop %v544
        %v546 = vpack.c.bf16 %v545, %v545
        %v548 = vsel %vm530, %v546, 0
        %vm550 = vcmask 1043456
        %v552 = vsel %vm550, %v514, 0
        %554 = vmatpush.bf16.msra.mxu0 0
        %555 = vmatpush.bf16.msra.mxu0 0
        %556 = vmatpush.bf16.msra.mxu0 0
        %557 = vmatpush.bf16.msra.mxu0 0
        %558 = vmatpush.bf16.msra.mxu0 0
        %559 = vmatpush.bf16.msra.mxu0 0
        %560 = vmatpush.bf16.msra.mxu0 0
        %561 = vmatpush.bf16.msra.mxu0 %v552
        %562 = vmatmul.bf16.gmra.mxu0 %v548
        %v563 = vpop.f32.mrf.mxu0
        %v564 = vadd.f32 0.0, %v563
        %v565 = vpop.f32.mrf.mxu0
        %566 = vdwg.mxu0
        %v567 = vld [vmem:[#allocation4] sm:$0xff]
        %v568 = vmul.f32 %v537, %v567
        %570 = vrot.lane.b32.xlu0 %v564, 112
        %v571 = vpop.permute.xlu0 %570
        %v573 = vadd.f32 %v568, %v571
        %vm574 = vcmask 7168
        %575 = vst.msk [vmem:[#allocation4] sm:$0xff] %vm574, %v573
        %v576 = vld [vmem:[#allocation5] sm:$0xff]
        %578 = vset.pattern.permute.xlu0 0
        %579 = vperm.xlu0 %578, %v537
        %v580 = vpop.permute.xlu0 %579
        %v582 = vmul.f32 %v580, %v576
        %v583 = vadd.f32 %v582, %v564
        %584 = vst [vmem:[#allocation5] sm:$0xff] %v583
        %585 = vst.msk [vmem:[#allocation3] sm:$0xff] %vm574, %v534
        // Predicated region
        $region69: #{tpu_custom_call.1} parent=43 // pred_check
          %p586 = pneg %p459
        $region70: #{tpu_custom_call.1} parent=43 // pred_check_branch
          %588 = sbr.rel (%p586) target = $region72
        $region71: #{tpu_custom_call.1} parent=43 // pred_region
          %v589 = vld [vmem:[#allocation4] sm:$0xff]
          %v590 = vrcp.pop %v589
          %v591 = vld [vmem:[#allocation5] sm:$0xff]
          %593 = vset.pattern.permute.xlu0 0
          %594 = vperm.xlu0 %593, %v590
          %v595 = vpop.permute.xlu0 %594
          %v597 = vmul.f32 %v591, %v595
          %598 = vst [vmem:[%s379] sm:$0xff] %v597
        $region72: #{tpu_custom_call.1} parent=43 // pred_fallthru
          _
        %s599 = sand.u32 %s204, 1
        %s600 = scalar_lea.sflag [#allocation10], %s599
        %s601 = sand.u32 %s204, 1
        %s602 = smul.addr %s601, 8
        %s603 = scalar_lea.vmem [#allocation16], %s602
        // Predicated region
        $region73: #{tpu_custom_call.1} parent=43 // pred_check
          %p604 = pneg %p214
        $region74: #{tpu_custom_call.1} parent=43 // pred_check_branch
          %606 = sbr.rel (%p604) target = $region76
        $region75: #{tpu_custom_call.1} parent=43 // pred_region
          %608 = vsyncadd %s600, 0
          %s609 = sadd.s32 %s33, %s32
          %s610 = smul.addr %s609, 8
          %s611 = scalar_lea.hbm %s6, %s610
          %s613 = sshll.u32 %s603, 4
          %s614 = int_to_ptr.vmem [resolvable:$true] %s613
          %s615 = sshll.u32 %s611, 4
          %s616 = int_to_ptr.hbm [resolvable:$true] %s615
          %618 = dma.vmem_to_hbm [thread:$0]  %s614, 128, %s616, %s600
        $region76: #{tpu_custom_call.1} parent=43 // pred_fallthru
          _
      $region44: #{tpu_custom_call.1} parent=5 // pred_fallthru
        _
      %p619 = scmp.le.s32.totalorder 2, %s22
      // Predicated region
      $region77: #{tpu_custom_call.1} parent=5 // pred_check
        %p620 = pneg %p619
      $region78: #{tpu_custom_call.1} parent=5 // pred_check_branch
        %622 = sbr.rel (%p620) target = $region80
      $region79: #{tpu_custom_call.1} parent=5 // pred_region
        %s623 = ssub.s32 %s22, 2
        // Predicated region
        $region81: #{tpu_custom_call.1} parent=79 // pred_check
          %p624 = pneg %p220
        $region82: #{tpu_custom_call.1} parent=79 // pred_check_branch
          %626 = sbr.rel (%p624) target = $region84
        $region83: #{tpu_custom_call.1} parent=79 // pred_region
          %s627 = sand.u32 %s205, 1
          %s628 = scalar_lea.sflag [#allocation10], %s627
          %s629 = sand.u32 %s205, 1
          %s630 = smul.addr %s629, 8
          %s631 = scalar_lea.vmem [#allocation16], %s630
          %633 = dma.done %s628, 128
        $region84: #{tpu_custom_call.1} parent=79 // pred_fallthru
          _
      $region80: #{tpu_custom_call.1} parent=5 // pred_fallthru
        _
    $region6: #{tpu_custom_call.1} parent=1 // loop_footer
      %s26 = sadd.s32 1, %s22
    $region7: #{tpu_custom_call.1} parent=1 // loop_footer_branch
      %21 = sbr.rel target = $region3
    $region8: #{tpu_custom_call.1} parent=1 // loop_exit
      _
    %634 = vsyncpa [#allocation9], 1
    %s635 = scalar_lea.sflag [#allocation9], 1
    %636 = vsyncpa %s635, 1
    %637 = vsyncpa [#allocation12], 1
    %s638 = scalar_lea.sflag [#allocation12], 1
    %639 = vsyncpa %s638, 1
    %640 = vsyncpa [#allocation15], 1
    %641 = vsyncpa [#allocation10], 1
    %s642 = scalar_lea.sflag [#allocation10], 1
    %643 = vsyncpa %s642, 1

</llo_original>
